<compile_context>
chip_gen: v7x
topology: tpu7x:2x2x1
jax: 0.10.0
libtpu: 0.0.40
codegen_flags: <defaults>
</compile_context>

<pallas_src>
import functools

import jax
import jax.numpy as jnp
from jax import lax
from jax.experimental import pallas as pl
from jax.experimental.pallas import tpu as pltpu


def _round_up(n, m):
    return ((n + m - 1) // m) * m


def _layernorm_kernel(x_ref, alpha_ref, beta_ref, o_ref, *, eps, dim):
    # x_ref: (tm, D) tile of independent rows; alpha_ref/beta_ref: (1, D) f32.
    x = x_ref[...].astype(jnp.float32)

    # Two-pass stats in f32 (numerically safe): mean, then centered moments.
    mean = jnp.sum(x, axis=-1, keepdims=True) * (1.0 / dim)
    centered = x - mean

    # Unbiased variance (ddof=1), matching torch.var's default.
    # NOTE: dim == 1 yields divide-by-zero / NaN, exactly like torch.var.
    var = jnp.sum(centered * centered, axis=-1, keepdims=True) * (1.0 / (dim - 1))
    inv_std = lax.rsqrt(var + eps)

    # Fused scale/shift; alpha/beta already f32 (pre-cast in the wrapper).
    o_ref[...] = (centered * inv_std * alpha_ref[...] + beta_ref[...]).astype(o_ref.dtype)


def layer_normalization(x, alpha, beta, *, eps=1e-05):
    """x: (B, S, D); alpha, beta: (1, 1, D). Returns (B, S, D), dtype of x."""
    B, S, D = x.shape
    rows = B * S
    itemsize = jnp.dtype(x.dtype).itemsize
    row_align = max(8, 32 // itemsize)          # 8 for f32, 16 for bf16

    # ---- row-tile sizing: ~2 MiB of f32 per block is past the HBM roofline
    # knee on all generations; bigger only costs VMEM and grid steps.
    target_block_f32 = 2 * 1024 * 1024
    tm_cap = max(row_align, (target_block_f32 // (D * 4)) // row_align * row_align)

    # Keep >= min_steps grid steps when rows permit: feeds both v7x TensorCores
    # and lets the DMA pipeline overlap compute on 1-TC chips.
    min_steps = 8
    tm = min(tm_cap, max(row_align, _round_up(pl.cdiv(rows, min_steps), row_align)))

    if rows <= row_align:
        # Single full-extent block (full array dim satisfies the (8,128) rule).
        tm = rows
        grid_m = 1
    else:
        # Partial edge block (if rows % tm != 0) is handled by Pallas: the OOB
        # rows read garbage and their writes are discarded; rows are
        # independent, so no wrapper-side padding or output slicing is needed.
        grid_m = pl.cdiv(rows, tm)

    # ---- wrapper-side layout plumbing (reshape only; no HBM copies of x)
    x2 = x.reshape(rows, D)
    a2 = alpha.reshape(1, D).astype(jnp.float32)
    b2 = beta.reshape(1, D).astype(jnp.float32)

    # ---- VMEM budget: double-buffered in/out blocks + in-kernel f32 temps
    # (x cast, centered, product, staged result) + resident alpha/beta.
    block_in = tm * D * itemsize
    block_f32 = tm * D * 4
    needed = 4 * block_in + 4 * block_f32 + 4 * D * 4

    try:
        vmem_cap = int(getattr(pltpu.get_tpu_info(), "vmem_capacity_bytes"))
    except Exception:
        vmem_cap = 64 * 1024 * 1024             # conservative (v7x per-TensorCore)
    cap_limit = min(48 * 1024 * 1024, int(0.75 * vmem_cap))
    vmem_limit = int(min(max(needed + (8 << 20), 32 << 20), cap_limit))
    if needed + (4 << 20) > vmem_limit:
        # TODO(synk): for very large D, split D across a second "arbitrary"
        # grid axis with partial-sum scratch instead of inflating VMEM.
        vmem_limit = int(min(needed + (8 << 20), int(0.9 * vmem_cap)))

    cost = pl.CostEstimate(
        flops=7 * rows * D,
        transcendentals=rows,
        bytes_accessed=2 * rows * D * itemsize + 2 * D * 4,
    )

    out = pl.pallas_call(
        functools.partial(_layernorm_kernel, eps=eps, dim=D),
        out_shape=jax.ShapeDtypeStruct((rows, D), x.dtype),
        grid_spec=pltpu.PrefetchScalarGridSpec(
            num_scalar_prefetch=0,
            grid=(grid_m,),
            in_specs=[
                pl.BlockSpec((tm, D), lambda i: (i, 0)),
                pl.BlockSpec((1, D), lambda i: (0, 0)),
                pl.BlockSpec((1, D), lambda i: (0, 0)),
            ],
            out_specs=pl.BlockSpec((tm, D), lambda i: (i, 0)),
        ),
        compiler_params=pltpu.CompilerParams(
            dimension_semantics=("parallel",),
            vmem_limit_bytes=vmem_limit,
        ),
        cost_estimate=cost,
    )(x2, a2, b2)

    return out.reshape(B, S, D)


def _reference_ln(x, alpha, beta, eps):
    mean = jnp.mean(x, axis=-1, keepdims=True)
    var = jnp.sum((x - mean) ** 2, axis=-1, keepdims=True) / (x.shape[-1] - 1)
    return alpha * ((x - mean) / jnp.sqrt(var + eps)) + beta


if __name__ == "__main__":
    key = jax.random.PRNGKey(0)
    k1, k2, k3 = jax.random.split(key, 3)

    # Primary shape consistent with the module (default dimension=512).
    B, S, D = 2, 8, 512
    x = jax.random.normal(k1, (B, S, D), dtype=jnp.float32)
    # Parameters as in the module's __init__ (ones/zeros), with a small
    # perturbation so the fused scale/shift path is actually exercised.
    alpha = jnp.ones((1, 1, D), jnp.float32) + 0.1 * jax.random.normal(k2, (1, 1, D), jnp.float32)
    beta = 0.1 * jax.random.normal(k3, (1, 1, D), jnp.float32)

    out = jax.block_until_ready(layer_normalization(x, alpha, beta, eps=1e-05))
    ref = _reference_ln(x, alpha, beta, 1e-05)
    assert out.shape == (B, S, D)
    assert jnp.allclose(out, ref, atol=1e-5, rtol=1e-5), "mismatch vs reference (primary)"

    # Secondary shape: D not a multiple of 128 and rows not a multiple of the
    # row tile -> exercises full-D blocks + partial edge block (no HBM pad/slice).
    B2, S2, D2 = 1, 10, 200
    x2 = jax.random.normal(k1, (B2, S2, D2), dtype=jnp.float32)
    a2 = jnp.ones((1, 1, D2), jnp.float32)
    b2 = jnp.zeros((1, 1, D2), jnp.float32)
    out2 = jax.block_until_ready(layer_normalization(x2, a2, b2, eps=1e-05))
    ref2 = _reference_ln(x2, a2, b2, 1e-05)
    assert out2.shape == (B2, S2, D2)
    assert jnp.allclose(out2, ref2, atol=1e-5, rtol=1e-5), "mismatch vs reference (edge-block)"

    print("KERNEL_OK")
</pallas_src>

<mosaic_0001>
module attributes {stable_mosaic.version = 11 : i64} {
  func.func @_layernorm_kernel(%arg0: i32, %arg1: memref<8x512xf32, #tpu.memory_space<vmem>>, %arg2: memref<1x512xf32, #tpu.memory_space<vmem>>, %arg3: memref<1x512xf32, #tpu.memory_space<vmem>>, %arg4: memref<8x512xf32, #tpu.memory_space<vmem>>) attributes {dimension_semantics = [#tpu.dimension_semantics<parallel>], iteration_bounds = array<i64: 2>, scalar_prefetch = 0 : i64, scratch_operands = 0 : i64, tpu.core_type = #tpu.core_type<tc>, window_params = [{transform_indices = @transform_0, window_bounds = array<i64: 8, 512>}, {pipeline_mode = #tpu.pipeline_mode<synchronous>, transform_indices = @transform_1, window_bounds = array<i64: 1, 512>}, {pipeline_mode = #tpu.pipeline_mode<synchronous>, transform_indices = @transform_2, window_bounds = array<i64: 1, 512>}, {transform_indices = @transform_3, window_bounds = array<i64: 8, 512>}]} {
    %c0 = arith.constant 0 : index
    %c0_0 = arith.constant 0 : index
    %0 = vector.load %arg1[%c0, %c0_0] : memref<8x512xf32, #tpu.memory_space<vmem>>, vector<8x512xf32>
    %cst = arith.constant dense<0.000000e+00> : vector<8xf32>
    %1 = vector.multi_reduction <add>, %0, %cst [1] : vector<8x512xf32> to vector<8xf32>
    %2 = vector.shape_cast %1 : vector<8xf32> to vector<8x1xf32>
    %cst_1 = arith.constant 0.001953125 : f32
    %3 = vector.broadcast %cst_1 : f32 to vector<8x1xf32>
    %4 = arith.mulf %2, %3 : vector<8x1xf32>
    %5 = vector.broadcast %4 : vector<8x1xf32> to vector<8x512xf32>
    %6 = arith.subf %0, %5 : vector<8x512xf32>
    %7 = arith.mulf %6, %6 : vector<8x512xf32>
    %cst_2 = arith.constant dense<0.000000e+00> : vector<8xf32>
    %8 = vector.multi_reduction <add>, %7, %cst_2 [1] : vector<8x512xf32> to vector<8xf32>
    %9 = vector.shape_cast %8 : vector<8xf32> to vector<8x1xf32>
    %cst_3 = arith.constant 0.00195694715 : f32
    %10 = vector.broadcast %cst_3 : f32 to vector<8x1xf32>
    %11 = arith.mulf %9, %10 : vector<8x1xf32>
    %cst_4 = arith.constant 9.99999974E-6 : f32
    %12 = vector.broadcast %cst_4 : f32 to vector<8x1xf32>
    %13 = arith.addf %11, %12 : vector<8x1xf32>
    %14 = math.rsqrt %13 : vector<8x1xf32>
    %15 = vector.broadcast %14 : vector<8x1xf32> to vector<8x512xf32>
    %16 = arith.mulf %6, %15 : vector<8x512xf32>
    %c0_5 = arith.constant 0 : index
    %c0_6 = arith.constant 0 : index
    %17 = vector.load %arg2[%c0_5, %c0_6] : memref<1x512xf32, #tpu.memory_space<vmem>>, vector<1x512xf32>
    %18 = vector.broadcast %17 : vector<1x512xf32> to vector<8x512xf32>
    %19 = arith.mulf %16, %18 : vector<8x512xf32>
    %c0_7 = arith.constant 0 : index
    %c0_8 = arith.constant 0 : index
    %20 = vector.load %arg3[%c0_7, %c0_8] : memref<1x512xf32, #tpu.memory_space<vmem>>, vector<1x512xf32>
    %21 = vector.broadcast %20 : vector<1x512xf32> to vector<8x512xf32>
    %22 = arith.addf %19, %21 : vector<8x512xf32>
    %c0_9 = arith.constant 0 : index
    %c0_10 = arith.constant 0 : index
    %23 = vector.load %arg4[%c0_9, %c0_10] : memref<8x512xf32, #tpu.memory_space<vmem>>, vector<8x512xf32>
    tpu.vector_store %arg4[%c0_9, %c0_10], %22 {strides = array<i32>} : memref<8x512xf32, #tpu.memory_space<vmem>>, vector<8x512xf32>,
    return
  }
  func.func @transform_0(%arg0: i32) -> (i32, i32) {
    %c0_i32 = arith.constant 0 : i32
    %c0_i32_0 = arith.constant 0 : i32
    return %arg0, %c0_i32 : i32, i32
  }
  func.func @transform_1(%arg0: i32) -> (i32, i32) {
    %c0_i32 = arith.constant 0 : i32
    %c0_i32_0 = arith.constant 0 : i32
    %c0_i32_1 = arith.constant 0 : i32
    return %c0_i32, %c0_i32_0 : i32, i32
  }
  func.func @transform_2(%arg0: i32) -> (i32, i32) {
    %c0_i32 = arith.constant 0 : i32
    %c0_i32_0 = arith.constant 0 : i32
    %c0_i32_1 = arith.constant 0 : i32
    return %c0_i32, %c0_i32_0 : i32, i32
  }
  func.func @transform_3(%arg0: i32) -> (i32, i32) {
    %c0_i32 = arith.constant 0 : i32
    %c0_i32_0 = arith.constant 0 : i32
    return %arg0, %c0_i32 : i32, i32
  }
}

</mosaic_0001>

<llo_original>
// kernel: tpu_custom_call.1
$region0: #{tpu_custom_call.1}
  #allocation0 [shape = 'u32[]', space=smem, size = 0x4, offset = 0x4, fixed_abs, tag = 'smem constant byte address 0x4 - core index']
  #allocation1 [shape = 'u32[144,128]{1,0:T(1,128)}', space=vmem, size = 0x12000, scoped, tag = 'internal scratch']
  %s0 = inlined_call_operand.hbm [shape: f32[16,512], index: 0, kind: input, shape index: {}]
  %s1 = inlined_call_operand.hbm [shape: f32[1,512], index: 1, kind: input, shape index: {}]
  %s2 = inlined_call_operand.vmem [shape: f32[1,512], index: 2, kind: input, shape index: {}]
  %s3 = inlined_call_operand.hbm [shape: f32[16,512], index: 3, kind: output, shape index: {}]
  %s4 = sld [smem:[#allocation0]]
  $region53: #{tpu_custom_call.1} parent=0
    _
  %s6 = ssub.s32 1, %s4
  %s7 = scalar_select 0, %s6, %s4
  $region1: #{tpu_custom_call.1} parent=0
    #allocation2 [shape = 'u8[32768]{0}', space=vmem, size = 0x8000, scoped, tag = 'input window, operand 0']
    #allocation3 [shape = 's32[2]{0}', space=sflag, size = 0x8, scoped, tag = 'scoped memory for tpu_custom_call.1']
    #allocation4 [shape = 's32[2]{0}', space=sflag, size = 0x8, scoped, tag = 'scoped memory for tpu_custom_call.1']
    #allocation5 [shape = 'u8[2048]{0}', space=vmem, size = 0x800, scoped, tag = 'input window, operand 1, single buffered']
    #allocation6 [shape = 's32[1]{0}', space=sflag, size = 0x4, scoped, tag = 'scoped memory for tpu_custom_call.1']
    #allocation7 [shape = 'u8[32768]{0}', space=vmem, size = 0x8000, scoped, tag = 'output window, operand 0']
    %8 = vsyncpa [#allocation3], 0
    %s9 = scalar_lea.sflag [#allocation3], 1
    %10 = vsyncpa %s9, 0
    %11 = vsyncpa [#allocation6], 0
    %12 = vsyncpa [#allocation4], 0
    %s13 = scalar_lea.sflag [#allocation4], 1
    %14 = vsyncpa %s13, 0
    loop: start=0, step=1, limit=4
    $region2: #{tpu_custom_call.1} parent=1 // loop_pre_header
      _
    $region3: #{tpu_custom_call.1} parent=1 // loop_header
      %s16 = sphi 0, %s20
      %p17 = scmp.ge.s32.totalorder %s16, 4
      %s26 = sphi 0, %s28
      %s29 = sphi 0, %s26
      %s30 = sphi 0, %s29
      %s46 = sphi 0, %s30
      %s50 = sphi 0, %s50
      %s52 = sphi 0, %s50
      %s53 = sphi 0, %s52
      %s67 = sphi 0, %s53
      %s71 = sphi 0, %s71
      %s73 = sphi 0, %s71
      %s74 = sphi 0, %s73
      %s88 = sphi 0, %s74
      %s94 = sphi 0, %s96
      %s97 = sphi 0, %s94
      %s98 = sphi 0, %s97
      %s114 = sphi 0, %s98
    $region4: #{tpu_custom_call.1} parent=1 // loop_header_branch
      %19 = sbr.rel (%p17) target = $region8
    $region5: #{tpu_custom_call.1} parent=1 // loop_body
      %s21 = ssub.s32 %s16, 1
      %s22 = ssub.s32 %s16, 2
      %s23 = sadd.s32 %s16, 1
      %s24 = ssub.s32 %s16, %s23
      %p25 = scmp.eq.s32.totalorder %s24, 0
      %s27 = sadd.s32 %s26, 1
      %s28 = scalar_select %p25, %s26, %s27
      %p31 = pneg %p25
      %p32 = scmp.eq.s32.totalorder %s16, 1
      %p33 = por %p31, %p32
      %p34 = scmp.ne.s32.totalorder %s26, %s29
      %p35 = scmp.eq.s32.totalorder %s16, 0
      %p36 = por %p34, %p35
      %p37 = scmp.ne.s32.totalorder %s26, %s29
      %p38 = scmp.eq.s32.totalorder %s21, 1
      %p39 = por %p37, %p38
      %p40 = scmp.ne.s32.totalorder %s29, %s30
      %p41 = scmp.eq.s32.totalorder %s21, 0
      %p42 = por %p40, %p41
      %p43 = scmp.ne.s32.totalorder %s29, %s30
      %p44 = scmp.eq.s32.totalorder %s22, 1
      %p45 = por %p43, %p44
      %p47 = scmp.ne.s32.totalorder %s30, %s46
      %p48 = scmp.eq.s32.totalorder %s22, 0
      %p49 = por %p47, %p48
      %s51 = sadd.s32 %s50, 1
      %p54 = scmp.eq.s32.totalorder %s16, 1
      %p55 = scmp.ne.s32.totalorder %s50, %s52
      %p56 = scmp.eq.s32.totalorder %s16, 0
      %p57 = por %p55, %p56
      %p58 = scmp.ne.s32.totalorder %s50, %s52
      %p59 = scmp.eq.s32.totalorder %s21, 1
      %p60 = por %p58, %p59
      %p61 = scmp.ne.s32.totalorder %s52, %s53
      %p62 = scmp.eq.s32.totalorder %s21, 0
      %p63 = por %p61, %p62
      %p64 = scmp.ne.s32.totalorder %s52, %s53
      %p65 = scmp.eq.s32.totalorder %s22, 1
      %p66 = por %p64, %p65
      %p68 = scmp.ne.s32.totalorder %s53, %s67
      %p69 = scmp.eq.s32.totalorder %s22, 0
      %p70 = por %p68, %p69
      %s72 = sadd.s32 %s71, 1
      %p75 = scmp.eq.s32.totalorder %s16, 1
      %p76 = scmp.ne.s32.totalorder %s71, %s73
      %p77 = scmp.eq.s32.totalorder %s16, 0
      %p78 = por %p76, %p77
      %p79 = scmp.ne.s32.totalorder %s71, %s73
      %p80 = scmp.eq.s32.totalorder %s21, 1
      %p81 = por %p79, %p80
      %p82 = scmp.ne.s32.totalorder %s73, %s74
      %p83 = scmp.eq.s32.totalorder %s21, 0
      %p84 = por %p82, %p83
      %p85 = scmp.ne.s32.totalorder %s73, %s74
      %p86 = scmp.eq.s32.totalorder %s22, 1
      %p87 = por %p85, %p86
      %p89 = scmp.ne.s32.totalorder %s74, %s88
      %p90 = scmp.eq.s32.totalorder %s22, 0
      %p91 = por %p89, %p90
      %s92 = ssub.s32 %s16, %s23
      %p93 = scmp.eq.s32.totalorder %s92, 0
      %s95 = sadd.s32 %s94, 1
      %s96 = scalar_select %p93, %s94, %s95
      %p99 = pneg %p93
      %p100 = scmp.eq.s32.totalorder %s16, 1
      %p101 = por %p99, %p100
      %p102 = scmp.ne.s32.totalorder %s94, %s97
      %p103 = scmp.eq.s32.totalorder %s16, 0
      %p104 = por %p102, %p103
      %p105 = scmp.ne.s32.totalorder %s94, %s97
      %p106 = scmp.eq.s32.totalorder %s21, 1
      %p107 = por %p105, %p106
      %p108 = scmp.ne.s32.totalorder %s97, %s98
      %p109 = scmp.eq.s32.totalorder %s21, 0
      %p110 = por %p108, %p109
      %p111 = scmp.ne.s32.totalorder %s97, %s98
      %p112 = scmp.eq.s32.totalorder %s22, 1
      %p113 = por %p111, %p112
      %p115 = scmp.ne.s32.totalorder %s98, %s114
      %p116 = scmp.eq.s32.totalorder %s22, 0
      %p117 = por %p115, %p116
      %p118 = scmp.le.s32.totalorder 1, %s16
      %p119 = scmp.lt.s32.totalorder %s16, 3
      %p120 = pnand %p118, %p119
      %p121 = pneg %p120
      // Predicated region
      $region9: #{tpu_custom_call.1} parent=5 // pred_check
        _
      $region10: #{tpu_custom_call.1} parent=5 // pred_check_branch
        %123 = sbr.rel (%p120) target = $region12
      $region11: #{tpu_custom_call.1} parent=5 // pred_region
        %s124 = ssub.s32 %s16, 1
        // Predicated region
        $region13: #{tpu_custom_call.1} parent=11 // pred_check
          %p125 = pneg %p63
        $region14: #{tpu_custom_call.1} parent=11 // pred_check_branch
          %127 = sbr.rel (%p125) target = $region16
        $region15: #{tpu_custom_call.1} parent=11 // pred_region
          %s129 = ssub.s32 64, 64
          %130 = vsyncadd [#allocation6], %s129
          %s132 = sshll.u32 [#allocation5], 4
          %s133 = int_to_ptr.vmem [resolvable:$true] %s132
          %135 = dma.hbm_to_vmem [thread:$0]  %s1, 64, %s133, [#allocation6]
        $region16: #{tpu_custom_call.1} parent=11 // pred_fallthru
          _
        // Predicated region
        $region17: #{tpu_custom_call.1} parent=11 // pred_check
          %p136 = pneg %p84
        $region18: #{tpu_custom_call.1} parent=11 // pred_check_branch
          %138 = sbr.rel (%p136) target = $region20
        $region19: #{tpu_custom_call.1} parent=11 // pred_region
          _
        $region20: #{tpu_custom_call.1} parent=11 // pred_fallthru
          _
      $region12: #{tpu_custom_call.1} parent=5 // pred_fallthru
        _
      %p139 = scmp.lt.s32.totalorder %s16, 2
      // Predicated region
      $region21: #{tpu_custom_call.1} parent=5 // pred_check
        %p140 = pneg %p139
      $region22: #{tpu_custom_call.1} parent=5 // pred_check_branch
        %142 = sbr.rel (%p140) target = $region24
      $region23: #{tpu_custom_call.1} parent=5 // pred_region
        // Predicated region
        $region25: #{tpu_custom_call.1} parent=23 // pred_check
          %p143 = pneg %p36
        $region26: #{tpu_custom_call.1} parent=23 // pred_check_branch
          %145 = sbr.rel (%p143) target = $region28
        $region27: #{tpu_custom_call.1} parent=23 // pred_region
          %s146 = sand.u32 %s26, 1
          %s147 = scalar_lea.sflag [#allocation3], %s146
          %s148 = sand.u32 %s26, 1
          %s149 = smul.addr %s148, 32
          %s150 = scalar_lea.vmem [#allocation2], %s149
          %s152 = ssub.s32 512, 512
          %153 = vsyncadd %s147, %s152
          %s154 = smul.addr %s16, 4
          %s155 = smul.addr %s154, 128
          %s156 = scalar_lea.hbm %s0, %s155
          %s158 = sshll.u32 %s150, 4
          %s159 = int_to_ptr.vmem [resolvable:$true] %s158
          %161 = dma.hbm_to_vmem [thread:$0]  %s156, 512, %s159, %s147
        $region28: #{tpu_custom_call.1} parent=23 // pred_fallthru
          _
      $region24: #{tpu_custom_call.1} parent=5 // pred_fallthru
        _
      %p162 = scmp.le.s32.totalorder 1, %s16
      %p163 = scmp.lt.s32.totalorder %s16, 3
      %p164 = pnand %p162, %p163
      %p165 = pneg %p164
      // Predicated region
      $region29: #{tpu_custom_call.1} parent=5 // pred_check
        _
      $region30: #{tpu_custom_call.1} parent=5 // pred_check_branch
        %167 = sbr.rel (%p164) target = $region32
      $region31: #{tpu_custom_call.1} parent=5 // pred_region
        %s168 = ssub.s32 %s16, 1
        %s169 = sand.u32 %s29, 1
        %s170 = scalar_lea.sflag [#allocation3], %s169
        %s171 = sand.u32 %s29, 1
        %s172 = smul.addr %s171, 32
        %s173 = scalar_lea.vmem [#allocation2], %s172
        // Predicated region
        $region33: #{tpu_custom_call.1} parent=31 // pred_check
          %p174 = pneg %p42
        $region34: #{tpu_custom_call.1} parent=31 // pred_check_branch
          %176 = sbr.rel (%p174) target = $region36
        $region35: #{tpu_custom_call.1} parent=31 // pred_region
          %177 = dma.done %s170, 512
        $region36: #{tpu_custom_call.1} parent=31 // pred_fallthru
          _
        // Predicated region
        $region37: #{tpu_custom_call.1} parent=31 // pred_check
          %p178 = pneg %p63
        $region38: #{tpu_custom_call.1} parent=31 // pred_check_branch
          %180 = sbr.rel (%p178) target = $region40
        $region39: #{tpu_custom_call.1} parent=31 // pred_region
          %181 = dma.done [#allocation6], 64
        $region40: #{tpu_custom_call.1} parent=31 // pred_fallthru
          _
        %s182 = sand.u32 %s29, 1
        %s183 = scalar_lea.sflag [#allocation3], %s182
        %s184 = sand.u32 %s29, 1
        %s185 = smul.addr %s184, 32
        %s186 = scalar_lea.vmem [#allocation2], %s185
        %p187 = pneg %p42
        %p188 = pneg %p39
        %p189 = pneg %p63
        %p190 = pneg %p60
        %p191 = pneg %p84
        %p192 = pneg %p81
        %p193 = pneg %p110
        %p194 = pneg %p107
        %s195 = sand.u32 %s97, 1
        %s196 = scalar_lea.sflag [#allocation4], %s195
        %s197 = sand.u32 %s97, 1
        %s198 = smul.addr %s197, 32
        %s199 = scalar_lea.vmem [#allocation7], %s198
        %v200 = vld [vmem:[%s173] sm:$0xff]
        %v201 = vld [vmem:[%s173 + $0x8] sm:$0xff]
        %v202 = vld [vmem:[%s173 + $0x10] sm:$0xff]
        %v203 = vld [vmem:[%s173 + $0x18] sm:$0xff]
        %v204 = vadd.f32 %v200, %v201
        %v205 = vadd.f32 %v204, %v202
        %v206 = vadd.f32 %v205, %v203
        %207 = vadd.xlane.f32.xlu0 %v206
        %v208 = vpop.xlane.xlu0 %207
        %v209 = vmul.f32 %v208, 0.001953125
        %v210 = vsub.f32 %v200, %v209
        %v211 = vsub.f32 %v201, %v209
        %v212 = vsub.f32 %v202, %v209
        %v213 = vsub.f32 %v203, %v209
        %v214 = vmul.f32 %v210, %v210
        %v215 = vmul.f32 %v211, %v211
        %v216 = vmul.f32 %v212, %v212
        %v217 = vmul.f32 %v213, %v213
        %v218 = vadd.f32 %v214, %v215
        %v219 = vadd.f32 %v218, %v216
        %v220 = vadd.f32 %v219, %v217
        %221 = vadd.xlane.f32.xlu0 %v220
        %v222 = vpop.xlane.xlu0 %221
        %v223 = vmul.f32 %v222, 0.0019569471
        %v224 = vadd.f32 %v223, 1e-05
        %v225 = vrsqrt.pop %v224
        %v226 = vmul.f32 %v210, %v225
        %v227 = vmul.f32 %v211, %v225
        %v228 = vmul.f32 %v212, %v225
        %v229 = vmul.f32 %v213, %v225
        %v230 = vld [vmem:[#allocation5] sm:$0xf]
        %v232 = vlaneseq
        %v233 = vshrl.u32 %v232, 7
        %v234 = vsub.s32 0, %v233
        %v235 = vrot.slane %v230, %v234
        %v236 = vlaneseq
        %v237 = vshrl.u32 %v236, 7
        %v238 = vsub.s32 1, %v237
        %v239 = vrot.slane %v230, %v238
        %v240 = vlaneseq
        %v241 = vshrl.u32 %v240, 7
        %v242 = vsub.s32 2, %v241
        %v243 = vrot.slane %v230, %v242
        %v244 = vlaneseq
        %v245 = vshrl.u32 %v244, 7
        %v246 = vsub.s32 3, %v245
        %v247 = vrot.slane %v230, %v246
        %v252 = vmul.f32 %v226, %v235
        %v253 = vmul.f32 %v227, %v239
        %v254 = vmul.f32 %v228, %v243
        %v255 = vmul.f32 %v229, %v247
        %v256 = vld [vmem:[%s2] sm:$0xf]
        %v258 = vlaneseq
        %v259 = vshrl.u32 %v258, 7
        %v260 = vsub.s32 0, %v259
        %v261 = vrot.slane %v256, %v260
        %v262 = vlaneseq
        %v263 = vshrl.u32 %v262, 7
        %v264 = vsub.s32 1, %v263
        %v265 = vrot.slane %v256, %v264
        %v266 = vlaneseq
        %v267 = vshrl.u32 %v266, 7
        %v268 = vsub.s32 2, %v267
        %v269 = vrot.slane %v256, %v268
        %v270 = vlaneseq
        %v271 = vshrl.u32 %v270, 7
        %v272 = vsub.s32 3, %v271
        %v273 = vrot.slane %v256, %v272
        %v278 = vadd.f32 %v252, %v261
        %v279 = vadd.f32 %v253, %v265
        %v280 = vadd.f32 %v254, %v269
        %v281 = vadd.f32 %v255, %v273
        %282 = vst [vmem:[%s199] sm:$0xff] %v278
        %283 = vst [vmem:[%s199 + $0x8] sm:$0xff] %v279
        %284 = vst [vmem:[%s199 + $0x10] sm:$0xff] %v280
        %285 = vst [vmem:[%s199 + $0x18] sm:$0xff] %v281
        %s286 = sand.u32 %s97, 1
        %s287 = scalar_lea.sflag [#allocation4], %s286
        %s288 = sand.u32 %s97, 1
        %s289 = smul.addr %s288, 32
        %s290 = scalar_lea.vmem [#allocation7], %s289
        // Predicated region
        $region41: #{tpu_custom_call.1} parent=31 // pred_check
          %p291 = pneg %p107
        $region42: #{tpu_custom_call.1} parent=31 // pred_check_branch
          %293 = sbr.rel (%p291) target = $region44
        $region43: #{tpu_custom_call.1} parent=31 // pred_region
          %s295 = ssub.s32 512, 512
          %296 = vsyncadd %s287, %s295
          %s297 = smul.addr %s21, 4
          %s298 = smul.addr %s297, 128
          %s299 = scalar_lea.hbm %s3, %s298
          %s301 = sshll.u32 %s290, 4
          %s302 = int_to_ptr.vmem [resolvable:$true] %s301
          %304 = dma.vmem_to_hbm [thread:$0]  %s302, 512, %s299, %s287
        $region44: #{tpu_custom_call.1} parent=31 // pred_fallthru
          _
      $region32: #{tpu_custom_call.1} parent=5 // pred_fallthru
        _
      %p305 = scmp.le.s32.totalorder 2, %s16
      // Predicated region
      $region45: #{tpu_custom_call.1} parent=5 // pred_check
        %p306 = pneg %p305
      $region46: #{tpu_custom_call.1} parent=5 // pred_check_branch
        %308 = sbr.rel (%p306) target = $region48
      $region47: #{tpu_custom_call.1} parent=5 // pred_region
        %s309 = ssub.s32 %s16, 2
        // Predicated region
        $region49: #{tpu_custom_call.1} parent=47 // pred_check
          %p310 = pneg %p113
        $region50: #{tpu_custom_call.1} parent=47 // pred_check_branch
          %312 = sbr.rel (%p310) target = $region52
        $region51: #{tpu_custom_call.1} parent=47 // pred_region
          %s313 = sand.u32 %s98, 1
          %s314 = scalar_lea.sflag [#allocation4], %s313
          %s315 = sand.u32 %s98, 1
          %s316 = smul.addr %s315, 32
          %s317 = scalar_lea.vmem [#allocation7], %s316
          %318 = dma.done %s314, 512
        $region52: #{tpu_custom_call.1} parent=47 // pred_fallthru
          _
      $region48: #{tpu_custom_call.1} parent=5 // pred_fallthru
        _
    $region6: #{tpu_custom_call.1} parent=1 // loop_footer
      %s20 = sadd.s32 1, %s16
    $region7: #{tpu_custom_call.1} parent=1 // loop_footer_branch
      %15 = sbr.rel target = $region3
    $region8: #{tpu_custom_call.1} parent=1 // loop_exit
      _
    %319 = vsyncpa [#allocation3], 1
    %s320 = scalar_lea.sflag [#allocation3], 1
    %321 = vsyncpa %s320, 1
    %322 = vsyncpa [#allocation6], 1
    %323 = vsyncpa [#allocation4], 1
    %s324 = scalar_lea.sflag [#allocation4], 1
    %325 = vsyncpa %s324, 1

</llo_original>
